<compile_context>
chip_gen: v7x
topology: tpu7x:2x2x1
jax: 0.10.0
libtpu: 0.0.40
codegen_flags: <defaults>
</compile_context>

<pallas_src>
import functools

import jax
import jax.numpy as jnp
from jax.experimental import pallas as pl
from jax.experimental.pallas import tpu as pltpu


def _round_up(n: int, m: int) -> int:
    return ((n + m - 1) // m) * m


# ---------------------------------------------------------------------------
# Fused kernel: chain of affine layers, all weights VMEM-resident.
# Argument order: (x_ref, w0_ref, b0_ref, w1_ref, b1_ref, ..., o_ref)
# ---------------------------------------------------------------------------
def _make_fused_kernel(num_layers: int):
    def kernel(x_ref, *refs):
        o_ref = refs[-1]
        h = x_ref[...]
        for l in range(num_layers):          # unrolled at trace time
            w = refs[2 * l][...]
            b = refs[2 * l + 1][...]
            h = (
                jnp.dot(
                    h,
                    w,
                    preferred_element_type=jnp.float32,
                    precision=jax.lax.Precision.HIGHEST,
                )
                + b
            )
        o_ref[...] = h.astype(o_ref.dtype)

    return kernel


# ---------------------------------------------------------------------------
# One-time parameter preparation: pad W/b to 128-multiples and keep them padded.
# ---------------------------------------------------------------------------
def prepare_padded_params(layers, biases=True, dtype=jnp.float32):
    """Returns a list of (W_padded, b_padded) with feature dims padded to 128."""
    padded = []
    for layer in layers:
        W = layer["W"].astype(dtype)
        K, N = W.shape
        Kp, Np = _round_up(K, 128), _round_up(N, 128)
        Wp = jnp.zeros((Kp, Np), dtype).at[:K, :N].set(W)
        if biases and "b" in layer:
            b = layer["b"].astype(dtype)
        else:
            b = jnp.zeros((N,), dtype)
        bp = jnp.zeros((1, Np), dtype).at[0, :N].set(b)
        padded.append((Wp, bp))
    return padded


# ---------------------------------------------------------------------------
# Fused forward: pad x once, run one pallas_call, slice the result once.
# ---------------------------------------------------------------------------
@functools.partial(jax.jit, static_argnames=("out_features", "tm_max"))
def char_nnet_forward_fused(x, padded_layers, *, out_features, tm_max=256):
    M, K = x.shape
    num_layers = len(padded_layers)
    Kp0 = padded_layers[0][0].shape[0]
    Np_last = padded_layers[-1][0].shape[1]

    # Batch tiling: single full-extent block for small batches, 256-row blocks
    # (parallel across cores) for large ones.  f32 sublane multiple is 8.
    if M <= tm_max:
        tm = _round_up(M, 8)
        Mp = tm
    else:
        tm = tm_max
        Mp = _round_up(M, tm)

    xp = jnp.pad(x, ((0, Mp - M), (0, Kp0 - K)))

    in_specs = [pl.BlockSpec((tm, Kp0), lambda i: (i, 0))]
    args = [xp]
    for Wp, bp in padded_layers:
        kp, np_ = Wp.shape
        # Constant block index -> weights/biases stay resident across grid steps.
        in_specs.append(pl.BlockSpec((kp, np_), lambda i: (0, 0)))
        in_specs.append(pl.BlockSpec((1, np_), lambda i: (0, 0)))
        args += [Wp, bp]

    out = pl.pallas_call(
        _make_fused_kernel(num_layers),
        out_shape=jax.ShapeDtypeStruct((Mp, Np_last), x.dtype),
        grid_spec=pltpu.PrefetchScalarGridSpec(
            num_scalar_prefetch=0,
            grid=(Mp // tm,),
            in_specs=in_specs,
            out_specs=pl.BlockSpec((tm, Np_last), lambda i: (i, 0)),
        ),
        compiler_params=pltpu.CompilerParams(
            dimension_semantics=("parallel",),
            vmem_limit_bytes=64 * 1024 * 1024,
        ),
    )(*args)

    return out[:M, :out_features]


# ---------------------------------------------------------------------------
# CharNnet-style deterministic init + reference forward.
# ---------------------------------------------------------------------------
def init_char_nnet(layer_sizes, biases=True, seed=36):
    key = jax.random.PRNGKey(seed)
    layers = []
    for i in range(len(layer_sizes) - 1):
        key, kw, kb = jax.random.split(key, 3)
        layer = {
            "W": jax.random.normal(
                kw, (layer_sizes[i], layer_sizes[i + 1]), dtype=jnp.float32
            )
        }
        if biases:
            layer["b"] = jax.random.normal(
                kb, (layer_sizes[i + 1],), dtype=jnp.float32
            )
        layers.append(layer)
    return layers


def char_nnet_forward_ref(x, layers, biases=True):
    for layer in layers:
        x = jnp.dot(x, layer["W"], precision=jax.lax.Precision.HIGHEST)
        if biases:
            x = x + layer["b"]
    return x


if __name__ == "__main__":
    # Small shapes consistent with the module: first/last layer = vocab width.
    layer_sizes = [32, 64, 32]
    batch = 8
    biases = True

    layers = init_char_nnet(layer_sizes, biases=biases, seed=36)
    padded_layers = prepare_padded_params(layers, biases=biases)

    key = jax.random.PRNGKey(0)
    x = jax.random.normal(key, (batch, layer_sizes[0]), dtype=jnp.float32)

    out = char_nnet_forward_fused(
        x, padded_layers, out_features=layer_sizes[-1]
    )
    out = jax.block_until_ready(out)

    ref = char_nnet_forward_ref(x, layers, biases=biases)
    assert out.shape == (batch, layer_sizes[-1])
    assert jnp.allclose(out, ref, atol=1e-3, rtol=1e-3), "mismatch vs reference"

    print("KERNEL_OK")
</pallas_src>

<mosaic_0001>
module attributes {stable_mosaic.version = 11 : i64} {
  func.func @kernel(%arg0: i32, %arg1: memref<8x128xf32, #tpu.memory_space<vmem>>, %arg2: memref<128x128xf32, #tpu.memory_space<vmem>>, %arg3: memref<1x128xf32, #tpu.memory_space<vmem>>, %arg4: memref<128x128xf32, #tpu.memory_space<vmem>>, %arg5: memref<1x128xf32, #tpu.memory_space<vmem>>, %arg6: memref<8x128xf32, #tpu.memory_space<vmem>>) attributes {dimension_semantics = [#tpu.dimension_semantics<parallel>], iteration_bounds = array<i64: 1>, scalar_prefetch = 0 : i64, scratch_operands = 0 : i64, tpu.core_type = #tpu.core_type<tc>, window_params = [{transform_indices = @transform_0, window_bounds = array<i64: 8, 128>}, {pipeline_mode = #tpu.pipeline_mode<synchronous>, transform_indices = @transform_1, window_bounds = array<i64: 128, 128>}, {pipeline_mode = #tpu.pipeline_mode<synchronous>, transform_indices = @transform_2, window_bounds = array<i64: 1, 128>}, {pipeline_mode = #tpu.pipeline_mode<synchronous>, transform_indices = @transform_3, window_bounds = array<i64: 128, 128>}, {pipeline_mode = #tpu.pipeline_mode<synchronous>, transform_indices = @transform_4, window_bounds = array<i64: 1, 128>}, {transform_indices = @transform_5, window_bounds = array<i64: 8, 128>}]} {
    %c0 = arith.constant 0 : index
    %c0_0 = arith.constant 0 : index
    %0 = vector.load %arg1[%c0, %c0_0] : memref<8x128xf32, #tpu.memory_space<vmem>>, vector<8x128xf32>
    %c0_1 = arith.constant 0 : index
    %c0_2 = arith.constant 0 : index
    %1 = vector.load %arg2[%c0_1, %c0_2] : memref<128x128xf32, #tpu.memory_space<vmem>>, vector<128x128xf32>
    %c0_3 = arith.constant 0 : index
    %c0_4 = arith.constant 0 : index
    %2 = vector.load %arg3[%c0_3, %c0_4] : memref<1x128xf32, #tpu.memory_space<vmem>>, vector<1x128xf32>
    %cst = arith.constant dense<0.000000e+00> : vector<8x128xf32>
    %3 = tpu.matmul %0, %1, %cst {dimension_numbers = #tpu.dot_dimension_numbers<[1], [0], [0], [1], [0, 0, 1, 1], [], []>, precision = #tpu.contract_precision<fp32>} : vector<8x128xf32>, vector<128x128xf32>, vector<8x128xf32> -> vector<8x128xf32>
    %4 = vector.broadcast %2 : vector<1x128xf32> to vector<8x128xf32>
    %5 = arith.addf %3, %4 : vector<8x128xf32>
    %c0_5 = arith.constant 0 : index
    %c0_6 = arith.constant 0 : index
    %6 = vector.load %arg4[%c0_5, %c0_6] : memref<128x128xf32, #tpu.memory_space<vmem>>, vector<128x128xf32>
    %c0_7 = arith.constant 0 : index
    %c0_8 = arith.constant 0 : index
    %7 = vector.load %arg5[%c0_7, %c0_8] : memref<1x128xf32, #tpu.memory_space<vmem>>, vector<1x128xf32>
    %cst_9 = arith.constant dense<0.000000e+00> : vector<8x128xf32>
    %8 = tpu.matmul %5, %6, %cst_9 {dimension_numbers = #tpu.dot_dimension_numbers<[1], [0], [0], [1], [0, 0, 1, 1], [], []>, precision = #tpu.contract_precision<fp32>} : vector<8x128xf32>, vector<128x128xf32>, vector<8x128xf32> -> vector<8x128xf32>
    %9 = vector.broadcast %7 : vector<1x128xf32> to vector<8x128xf32>
    %10 = arith.addf %8, %9 : vector<8x128xf32>
    %c0_10 = arith.constant 0 : index
    %c0_11 = arith.constant 0 : index
    %11 = vector.load %arg6[%c0_10, %c0_11] : memref<8x128xf32, #tpu.memory_space<vmem>>, vector<8x128xf32>
    tpu.vector_store %arg6[%c0_10, %c0_11], %10 {strides = array<i32>} : memref<8x128xf32, #tpu.memory_space<vmem>>, vector<8x128xf32>,
    return
  }
  func.func @transform_0(%arg0: i32) -> (i32, i32) {
    %c0_i32 = arith.constant 0 : i32
    %c0_i32_0 = arith.constant 0 : i32
    return %arg0, %c0_i32 : i32, i32
  }
  func.func @transform_1(%arg0: i32) -> (i32, i32) {
    %c0_i32 = arith.constant 0 : i32
    %c0_i32_0 = arith.constant 0 : i32
    %c0_i32_1 = arith.constant 0 : i32
    return %c0_i32, %c0_i32_0 : i32, i32
  }
  func.func @transform_2(%arg0: i32) -> (i32, i32) {
    %c0_i32 = arith.constant 0 : i32
    %c0_i32_0 = arith.constant 0 : i32
    %c0_i32_1 = arith.constant 0 : i32
    return %c0_i32, %c0_i32_0 : i32, i32
  }
  func.func @transform_3(%arg0: i32) -> (i32, i32) {
    %c0_i32 = arith.constant 0 : i32
    %c0_i32_0 = arith.constant 0 : i32
    %c0_i32_1 = arith.constant 0 : i32
    return %c0_i32, %c0_i32_0 : i32, i32
  }
  func.func @transform_4(%arg0: i32) -> (i32, i32) {
    %c0_i32 = arith.constant 0 : i32
    %c0_i32_0 = arith.constant 0 : i32
    %c0_i32_1 = arith.constant 0 : i32
    return %c0_i32, %c0_i32_0 : i32, i32
  }
  func.func @transform_5(%arg0: i32) -> (i32, i32) {
    %c0_i32 = arith.constant 0 : i32
    %c0_i32_0 = arith.constant 0 : i32
    return %arg0, %c0_i32 : i32, i32
  }
}

</mosaic_0001>

<llo_original>
// kernel: char_nnet_forward_fused.1
$region0: #{char_nnet_forward_fused.1}
  #allocation0 [shape = 'u32[]', space=smem, size = 0x4, offset = 0x4, fixed_abs, tag = 'smem constant byte address 0x4 - core index']
  #allocation1 [shape = 'u32[144,128]{1,0:T(1,128)}', space=vmem, size = 0x12000, scoped, tag = 'internal scratch']
  %s0 = inlined_call_operand.hbm [shape: f32[8,128], index: 0, kind: input, shape index: {}]
  %s1 = inlined_call_operand.hbm [shape: f32[128,128], index: 1, kind: input, shape index: {}]
  %s2 = inlined_call_operand.hbm [shape: f32[1,128], index: 2, kind: input, shape index: {}]
  %s3 = inlined_call_operand.hbm [shape: f32[128,128], index: 3, kind: input, shape index: {}]
  %s4 = inlined_call_operand.hbm [shape: f32[1,128], index: 4, kind: input, shape index: {}]
  %s5 = inlined_call_operand.hbm [shape: f32[8,128], index: 5, kind: output, shape index: {}]
  %s6 = sld [smem:[#allocation0]]
  $region50: #{char_nnet_forward_fused.1} parent=0
    _
  %s8 = ssub.s32 1, %s6
  %s9 = scalar_select 0, %s8, %s6
  $region1: #{char_nnet_forward_fused.1} parent=0
    #allocation2 [shape = 'u8[4096]{0}', space=vmem, size = 0x1000, scoped, tag = 'input window, operand 0, single buffered']
    #allocation3 [shape = 's32[1]{0}', space=sflag, size = 0x4, scoped, tag = 'scoped memory for char_nnet_forward_fused.1']
    #allocation4 [shape = 's32[1]{0}', space=sflag, size = 0x4, scoped, tag = 'scoped memory for char_nnet_forward_fused.1']
    #allocation5 [shape = 'u8[65536]{0}', space=vmem, size = 0x10000, scoped, tag = 'input window, operand 1, single buffered']
    #allocation6 [shape = 's32[1]{0}', space=sflag, size = 0x4, scoped, tag = 'scoped memory for char_nnet_forward_fused.1']
    #allocation7 [shape = 'u8[512]{0}', space=vmem, size = 0x400, scoped, tag = 'input window, operand 2, single buffered']
    #allocation8 [shape = 'u8[65536]{0}', space=vmem, size = 0x10000, scoped, tag = 'input window, operand 3, single buffered']
    #allocation9 [shape = 's32[1]{0}', space=sflag, size = 0x4, scoped, tag = 'scoped memory for char_nnet_forward_fused.1']
    #allocation10 [shape = 'u8[512]{0}', space=vmem, size = 0x400, scoped, tag = 'input window, operand 4, single buffered']
    #allocation11 [shape = 'u8[4096]{0}', space=vmem, size = 0x1000, scoped, tag = 'output window, operand 0, single buffered']
    %10 = vsyncpa [#allocation3], 0
    %11 = vsyncpa [#allocation6], 0
    %12 = vsyncpa [#allocation9], 0
    %13 = vsyncpa [#allocation4], 0
    // Predicated region
    $region2: #{char_nnet_forward_fused.1} parent=1 // pred_check
      _
    $region3: #{char_nnet_forward_fused.1} parent=1 // pred_check_branch
      %15 = sbr.rel (0) target = $region5
    $region4: #{char_nnet_forward_fused.1} parent=1 // pred_region
      %s17 = ssub.s32 128, 128
      %18 = vsyncadd [#allocation3], %s17
      %s20 = sshll.u32 [#allocation2], 4
      %s21 = int_to_ptr.vmem [resolvable:$true] %s20
      %23 = dma.hbm_to_vmem [thread:$0]  %s0, 128, %s21, [#allocation3]
    $region5: #{char_nnet_forward_fused.1} parent=1 // pred_fallthru
      _
    // Predicated region
    $region6: #{char_nnet_forward_fused.1} parent=1 // pred_check
      _
    $region7: #{char_nnet_forward_fused.1} parent=1 // pred_check_branch
      %25 = sbr.rel (0) target = $region9
    $region8: #{char_nnet_forward_fused.1} parent=1 // pred_region
      %s27 = ssub.s32 2048, 2048
      %28 = vsyncadd [#allocation6], %s27
      %s29 = sshll.u32 [#allocation5], 4
      %s30 = int_to_ptr.vmem [resolvable:$true] %s29
      %35 = dma.hbm_to_vmem [thread:$0]  %s1, 2048, %s30, [#allocation6], 128, 128, 8
    $region9: #{char_nnet_forward_fused.1} parent=1 // pred_fallthru
      _
    // Predicated region
    $region10: #{char_nnet_forward_fused.1} parent=1 // pred_check
      _
    $region11: #{char_nnet_forward_fused.1} parent=1 // pred_check_branch
      %37 = sbr.rel (0) target = $region13
    $region12: #{char_nnet_forward_fused.1} parent=1 // pred_region
      %s39 = ssub.s32 16, 16
      %40 = vsyncadd [#allocation6], %s39
      %s42 = sshll.u32 [#allocation7], 4
      %s43 = int_to_ptr.vmem [resolvable:$true] %s42
      %45 = dma.hbm_to_vmem [thread:$0]  %s2, 16, %s43, [#allocation6]
    $region13: #{char_nnet_forward_fused.1} parent=1 // pred_fallthru
      _
    // Predicated region
    $region14: #{char_nnet_forward_fused.1} parent=1 // pred_check
      _
    $region15: #{char_nnet_forward_fused.1} parent=1 // pred_check_branch
      %47 = sbr.rel (0) target = $region17
    $region16: #{char_nnet_forward_fused.1} parent=1 // pred_region
      %s49 = ssub.s32 2048, 2048
      %50 = vsyncadd [#allocation9], %s49
      %s51 = sshll.u32 [#allocation8], 4
      %s52 = int_to_ptr.vmem [resolvable:$true] %s51
      %57 = dma.hbm_to_vmem [thread:$0]  %s3, 2048, %s52, [#allocation9], 128, 128, 8
    $region17: #{char_nnet_forward_fused.1} parent=1 // pred_fallthru
      _
    // Predicated region
    $region18: #{char_nnet_forward_fused.1} parent=1 // pred_check
      _
    $region19: #{char_nnet_forward_fused.1} parent=1 // pred_check_branch
      %59 = sbr.rel (0) target = $region21
    $region20: #{char_nnet_forward_fused.1} parent=1 // pred_region
      %s61 = ssub.s32 16, 16
      %62 = vsyncadd [#allocation9], %s61
      %s64 = sshll.u32 [#allocation10], 4
      %s65 = int_to_ptr.vmem [resolvable:$true] %s64
      %67 = dma.hbm_to_vmem [thread:$0]  %s4, 16, %s65, [#allocation9]
    $region21: #{char_nnet_forward_fused.1} parent=1 // pred_fallthru
      _
    // Predicated region
    $region22: #{char_nnet_forward_fused.1} parent=1 // pred_check
      _
    $region23: #{char_nnet_forward_fused.1} parent=1 // pred_check_branch
      %69 = sbr.rel (0) target = $region25
    $region24: #{char_nnet_forward_fused.1} parent=1 // pred_region
      %70 = dma.done [#allocation3], 128
    $region25: #{char_nnet_forward_fused.1} parent=1 // pred_fallthru
      _
    // Predicated region
    $region26: #{char_nnet_forward_fused.1} parent=1 // pred_check
      _
    $region27: #{char_nnet_forward_fused.1} parent=1 // pred_check_branch
      %72 = sbr.rel (0) target = $region29
    $region28: #{char_nnet_forward_fused.1} parent=1 // pred_region
      %73 = dma.done [#allocation6], 2048
    $region29: #{char_nnet_forward_fused.1} parent=1 // pred_fallthru
      _
    // Predicated region
    $region30: #{char_nnet_forward_fused.1} parent=1 // pred_check
      _
    $region31: #{char_nnet_forward_fused.1} parent=1 // pred_check_branch
      %75 = sbr.rel (0) target = $region33
    $region32: #{char_nnet_forward_fused.1} parent=1 // pred_region
      %76 = dma.done [#allocation6], 16
    $region33: #{char_nnet_forward_fused.1} parent=1 // pred_fallthru
      _
    // Predicated region
    $region34: #{char_nnet_forward_fused.1} parent=1 // pred_check
      _
    $region35: #{char_nnet_forward_fused.1} parent=1 // pred_check_branch
      %78 = sbr.rel (0) target = $region37
    $region36: #{char_nnet_forward_fused.1} parent=1 // pred_region
      %79 = dma.done [#allocation9], 2048
    $region37: #{char_nnet_forward_fused.1} parent=1 // pred_fallthru
      _
    // Predicated region
    $region38: #{char_nnet_forward_fused.1} parent=1 // pred_check
      _
    $region39: #{char_nnet_forward_fused.1} parent=1 // pred_check_branch
      %81 = sbr.rel (0) target = $region41
    $region40: #{char_nnet_forward_fused.1} parent=1 // pred_region
      %82 = dma.done [#allocation9], 16
    $region41: #{char_nnet_forward_fused.1} parent=1 // pred_fallthru
      _
    %v83 = vld [vmem:[#allocation2] sm:$0xff]
    %v84 = vld [vmem:[#allocation5] sm:$0xff]
    %v85 = vld [vmem:[#allocation5 + $0x8] sm:$0xff]
    %v86 = vld [vmem:[#allocation5 + $0x10] sm:$0xff]
    %v87 = vld [vmem:[#allocation5 + $0x18] sm:$0xff]
    %v88 = vld [vmem:[#allocation5 + $0x20] sm:$0xff]
    %v89 = vld [vmem:[#allocation5 + $0x28] sm:$0xff]
    %v90 = vld [vmem:[#allocation5 + $0x30] sm:$0xff]
    %v91 = vld [vmem:[#allocation5 + $0x38] sm:$0xff]
    %v92 = vld [vmem:[#allocation5 + $0x40] sm:$0xff]
    %v93 = vld [vmem:[#allocation5 + $0x48] sm:$0xff]
    %v94 = vld [vmem:[#allocation5 + $0x50] sm:$0xff]
    %v95 = vld [vmem:[#allocation5 + $0x58] sm:$0xff]
    %v96 = vld [vmem:[#allocation5 + $0x60] sm:$0xff]
    %v97 = vld [vmem:[#allocation5 + $0x68] sm:$0xff]
    %v98 = vld [vmem:[#allocation5 + $0x70] sm:$0xff]
    %v99 = vld [vmem:[#allocation5 + $0x78] sm:$0xff]
    %v100 = vld [vmem:[#allocation7] sm:$0x1]
    %v102 = vlaneseq
    %v103 = vshrl.u32 %v102, 7
    %v104 = vsub.s32 0, %v103
    %v105 = vrot.slane %v100, %v104
    %107 = vmatprep.subr.mxu0 0.0
    %v108 = vand.u32 %v84, 4294901760
    %109 = vmatpush1.msra.mxu0 %v108
    %110 = vmatprep.subr.mxu0 0.0
    %v111 = vand.u32 %v85, 4294901760
    %112 = vmatpush1.msra.mxu0 %v111
    %113 = vmatprep.subr.mxu0 0.0
    %v114 = vand.u32 %v86, 4294901760
    %115 = vmatpush1.msra.mxu0 %v114
    %116 = vmatprep.subr.mxu0 0.0
    %v117 = vand.u32 %v87, 4294901760
    %118 = vmatpush1.msra.mxu0 %v117
    %119 = vmatprep.subr.mxu0 0.0
    %v120 = vand.u32 %v88, 4294901760
    %121 = vmatpush1.msra.mxu0 %v120
    %122 = vmatprep.subr.mxu0 0.0
    %v123 = vand.u32 %v89, 4294901760
    %124 = vmatpush1.msra.mxu0 %v123
    %125 = vmatprep.subr.mxu0 0.0
    %v126 = vand.u32 %v90, 4294901760
    %127 = vmatpush1.msra.mxu0 %v126
    %128 = vmatprep.subr.mxu0 0.0
    %v129 = vand.u32 %v91, 4294901760
    %130 = vmatpush1.msra.mxu0 %v129
    %131 = vmatprep.subr.mxu0 0.0
    %v132 = vand.u32 %v92, 4294901760
    %133 = vmatpush1.msra.mxu0 %v132
    %134 = vmatprep.subr.mxu0 0.0
    %v135 = vand.u32 %v93, 4294901760
    %136 = vmatpush1.msra.mxu0 %v135
    %137 = vmatprep.subr.mxu0 0.0
    %v138 = vand.u32 %v94, 4294901760
    %139 = vmatpush1.msra.mxu0 %v138
    %140 = vmatprep.subr.mxu0 0.0
    %v141 = vand.u32 %v95, 4294901760
    %142 = vmatpush1.msra.mxu0 %v141
    %143 = vmatprep.subr.mxu0 0.0
    %v144 = vand.u32 %v96, 4294901760
    %145 = vmatpush1.msra.mxu0 %v144
    %146 = vmatprep.subr.mxu0 0.0
    %v147 = vand.u32 %v97, 4294901760
    %148 = vmatpush1.msra.mxu0 %v147
    %149 = vmatprep.subr.mxu0 0.0
    %v150 = vand.u32 %v98, 4294901760
    %151 = vmatpush1.msra.mxu0 %v150
    %152 = vmatprep.subr.mxu0 0.0
    %v153 = vand.u32 %v99, 4294901760
    %154 = vmatpush1.msra.mxu0 %v153
    %155 = vmatprep.subr.mxu0 0.0
    %156 = vmatpush1.msra.mxu0 0.0
    %157 = vmatprep.subr.mxu0 0.0
    %158 = vmatpush1.msra.mxu0 0.0
    %159 = vmatprep.subr.mxu0 0.0
    %160 = vmatpush1.msra.mxu0 0.0
    %161 = vmatprep.subr.mxu0 0.0
    %162 = vmatpush1.msra.mxu0 0.0
    %163 = vmatprep.subr.mxu0 0.0
    %164 = vmatpush1.msra.mxu0 0.0
    %165 = vmatprep.subr.mxu0 0.0
    %166 = vmatpush1.msra.mxu0 0.0
    %167 = vmatprep.subr.mxu0 0.0
    %168 = vmatpush1.msra.mxu0 0.0
    %169 = vmatprep.subr.mxu0 0.0
    %170 = vmatpush1.msra.mxu0 0.0
    %171 = vmatprep.subr.mxu0 0.0
    %172 = vmatpush1.msra.mxu0 0.0
    %173 = vmatprep.subr.mxu0 0.0
    %174 = vmatpush1.msra.mxu0 0.0
    %175 = vmatprep.subr.mxu0 0.0
    %176 = vmatpush1.msra.mxu0 0.0
    %177 = vmatprep.subr.mxu0 0.0
    %178 = vmatpush1.msra.mxu0 0.0
    %179 = vmatprep.subr.mxu0 0.0
    %180 = vmatpush1.msra.mxu0 0.0
    %181 = vmatprep.subr.mxu0 0.0
    %182 = vmatpush1.msra.mxu0 0.0
    %183 = vmatprep.subr.mxu0 0.0
    %184 = vmatpush1.msra.mxu0 0.0
    %185 = vmatprep.subr.mxu0 0.0
    %186 = vmatpush1.msra.mxu0 0.0
    %187 = vmatprep.mubr.f32.mxu0 0.0
    %v188 = vand.u32 %v83, 4294901760
    %v189 = vsub.f32 %v83, %v188
    %v190 = vand.u32 %v189, 4294901760
    %v191 = vsub.f32 %v189, %v190
    %v192 = vand.u32 %v191, 4294901760
    %193 = vmatmul.mubr.f32.gmra.mrb[0].mxu0 %v192
    %v194 = vpop.f32.mrb[0].mxu0
    %v195 = vadd.f32 %v105, %v194
    %v196 = vpop.f32.mrb[0].mxu0
    %197 = vdwg.mxu0
    %198 = vmatprep.subr.mxu0 0.0
    %v199 = vand.u32 %v84, 4294901760
    %v200 = vsub.f32 %v84, %v199
    %v201 = vand.u32 %v200, 4294901760
    %v202 = vsub.f32 %v200, %v201
    %v203 = vand.u32 %v202, 4294901760
    %204 = vmatpush1.msra.mxu0 %v203
    %205 = vmatprep.subr.mxu0 0.0
    %v206 = vand.u32 %v85, 4294901760
    %v207 = vsub.f32 %v85, %v206
    %v208 = vand.u32 %v207, 4294901760
    %v209 = vsub.f32 %v207, %v208
    %v210 = vand.u32 %v209, 4294901760
    %211 = vmatpush1.msra.mxu0 %v210
    %212 = vmatprep.subr.mxu0 0.0
    %v213 = vand.u32 %v86, 4294901760
    %v214 = vsub.f32 %v86, %v213
    %v215 = vand.u32 %v214, 4294901760
    %v216 = vsub.f32 %v214, %v215
    %v217 = vand.u32 %v216, 4294901760
    %218 = vmatpush1.msra.mxu0 %v217
    %219 = vmatprep.subr.mxu0 0.0
    %v220 = vand.u32 %v87, 4294901760
    %v221 = vsub.f32 %v87, %v220
    %v222 = vand.u32 %v221, 4294901760
    %v223 = vsub.f32 %v221, %v222
    %v224 = vand.u32 %v223, 4294901760
    %225 = vmatpush1.msra.mxu0 %v224
    %226 = vmatprep.subr.mxu0 0.0
    %v227 = vand.u32 %v88, 4294901760
    %v228 = vsub.f32 %v88, %v227
    %v229 = vand.u32 %v228, 4294901760
    %v230 = vsub.f32 %v228, %v229
    %v231 = vand.u32 %v230, 4294901760
    %232 = vmatpush1.msra.mxu0 %v231
    %233 = vmatprep.subr.mxu0 0.0
    %v234 = vand.u32 %v89, 4294901760
    %v235 = vsub.f32 %v89, %v234
    %v236 = vand.u32 %v235, 4294901760
    %v237 = vsub.f32 %v235, %v236
    %v238 = vand.u32 %v237, 4294901760
    %239 = vmatpush1.msra.mxu0 %v238
    %240 = vmatprep.subr.mxu0 0.0
    %v241 = vand.u32 %v90, 4294901760
    %v242 = vsub.f32 %v90, %v241
    %v243 = vand.u32 %v242, 4294901760
    %v244 = vsub.f32 %v242, %v243
    %v245 = vand.u32 %v244, 4294901760
    %246 = vmatpush1.msra.mxu0 %v245
    %247 = vmatprep.subr.mxu0 0.0
    %v248 = vand.u32 %v91, 4294901760
    %v249 = vsub.f32 %v91, %v248
    %v250 = vand.u32 %v249, 4294901760
    %v251 = vsub.f32 %v249, %v250
    %v252 = vand.u32 %v251, 4294901760
    %253 = vmatpush1.msra.mxu0 %v252
    %254 = vmatprep.subr.mxu0 0.0
    %v255 = vand.u32 %v92, 4294901760
    %v256 = vsub.f32 %v92, %v255
    %v257 = vand.u32 %v256, 4294901760
    %v258 = vsub.f32 %v256, %v257
    %v259 = vand.u32 %v258, 4294901760
    %260 = vmatpush1.msra.mxu0 %v259
    %261 = vmatprep.subr.mxu0 0.0
    %v262 = vand.u32 %v93, 4294901760
    %v263 = vsub.f32 %v93, %v262
    %v264 = vand.u32 %v263, 4294901760
    %v265 = vsub.f32 %v263, %v264
    %v266 = vand.u32 %v265, 4294901760
    %267 = vmatpush1.msra.mxu0 %v266
    %268 = vmatprep.subr.mxu0 0.0
    %v269 = vand.u32 %v94, 4294901760
    %v270 = vsub.f32 %v94, %v269
    %v271 = vand.u32 %v270, 4294901760
    %v272 = vsub.f32 %v270, %v271
    %v273 = vand.u32 %v272, 4294901760
    %274 = vmatpush1.msra.mxu0 %v273
    %275 = vmatprep.subr.mxu0 0.0
    %v276 = vand.u32 %v95, 4294901760
    %v277 = vsub.f32 %v95, %v276
    %v278 = vand.u32 %v277, 4294901760
    %v279 = vsub.f32 %v277, %v278
    %v280 = vand.u32 %v279, 4294901760
    %281 = vmatpush1.msra.mxu0 %v280
    %282 = vmatprep.subr.mxu0 0.0
    %v283 = vand.u32 %v96, 4294901760
    %v284 = vsub.f32 %v96, %v283
    %v285 = vand.u32 %v284, 4294901760
    %v286 = vsub.f32 %v284, %v285
    %v287 = vand.u32 %v286, 4294901760
    %288 = vmatpush1.msra.mxu0 %v287
    %289 = vmatprep.subr.mxu0 0.0
    %v290 = vand.u32 %v97, 4294901760
    %v291 = vsub.f32 %v97, %v290
    %v292 = vand.u32 %v291, 4294901760
    %v293 = vsub.f32 %v291, %v292
    %v294 = vand.u32 %v293, 4294901760
    %295 = vmatpush1.msra.mxu0 %v294
    %296 = vmatprep.subr.mxu0 0.0
    %v297 = vand.u32 %v98, 4294901760
    %v298 = vsub.f32 %v98, %v297
    %v299 = vand.u32 %v298, 4294901760
    %v300 = vsub.f32 %v298, %v299
    %v301 = vand.u32 %v300, 4294901760
    %302 = vmatpush1.msra.mxu0 %v301
    %303 = vmatprep.subr.mxu0 0.0
    %v304 = vand.u32 %v99, 4294901760
    %v305 = vsub.f32 %v99, %v304
    %v306 = vand.u32 %v305, 4294901760
    %v307 = vsub.f32 %v305, %v306
    %v308 = vand.u32 %v307, 4294901760
    %309 = vmatpush1.msra.mxu0 %v308
    %310 = vmatprep.subr.mxu0 0.0
    %311 = vmatpush1.msra.mxu0 0.0
    %312 = vmatprep.subr.mxu0 0.0
    %313 = vmatpush1.msra.mxu0 0.0
    %314 = vmatprep.subr.mxu0 0.0
    %315 = vmatpush1.msra.mxu0 0.0
    %316 = vmatprep.subr.mxu0 0.0
    %317 = vmatpush1.msra.mxu0 0.0
    %318 = vmatprep.subr.mxu0 0.0
    %319 = vmatpush1.msra.mxu0 0.0
    %320 = vmatprep.subr.mxu0 0.0
    %321 = vmatpush1.msra.mxu0 0.0
    %322 = vmatprep.subr.mxu0 0.0
    %323 = vmatpush1.msra.mxu0 0.0
    %324 = vmatprep.subr.mxu0 0.0
    %325 = vmatpush1.msra.mxu0 0.0
    %326 = vmatprep.subr.mxu0 0.0
    %327 = vmatpush1.msra.mxu0 0.0
    %328 = vmatprep.subr.mxu0 0.0
    %329 = vmatpush1.msra.mxu0 0.0
    %330 = vmatprep.subr.mxu0 0.0
    %331 = vmatpush1.msra.mxu0 0.0
    %332 = vmatprep.subr.mxu0 0.0
    %333 = vmatpush1.msra.mxu0 0.0
    %334 = vmatprep.subr.mxu0 0.0
    %335 = vmatpush1.msra.mxu0 0.0
    %336 = vmatprep.subr.mxu0 0.0
    %337 = vmatpush1.msra.mxu0 0.0
    %338 = vmatprep.subr.mxu0 0.0
    %339 = vmatpush1.msra.mxu0 0.0
    %340 = vmatprep.subr.mxu0 0.0
    %341 = vmatpush1.msra.mxu0 0.0
    %342 = vmatprep.mubr.f32.mxu0 0.0
    %v343 = vand.u32 %v83, 4294901760
    %344 = vmatmul.mubr.f32.gmra.mrb[0].mxu0 %v343
    %v345 = vpop.f32.mrb[0].mxu0
    %v346 = vadd.f32 %v195, %v345
    %v347 = vpop.f32.mrb[0].mxu0
    %348 = vdwg.mxu0
    %349 = vmatprep.subr.mxu0 0.0
    %v350 = vand.u32 %v84, 4294901760
    %v351 = vsub.f32 %v84, %v350
    %352 = vmatpush1.msra.mxu0 %v351
    %353 = vmatprep.subr.mxu0 0.0
    %v354 = vand.u32 %v85, 4294901760
    %v355 = vsub.f32 %v85, %v354
    %356 = vmatpush1.msra.mxu0 %v355
    %357 = vmatprep.subr.mxu0 0.0
    %v358 = vand.u32 %v86, 4294901760
    %v359 = vsub.f32 %v86, %v358
    %360 = vmatpush1.msra.mxu0 %v359
    %361 = vmatprep.subr.mxu0 0.0
    %v362 = vand.u32 %v87, 4294901760
    %v363 = vsub.f32 %v87, %v362
    %364 = vmatpush1.msra.mxu0 %v363
    %365 = vmatprep.subr.mxu0 0.0
    %v366 = vand.u32 %v88, 4294901760
    %v367 = vsub.f32 %v88, %v366
    %368 = vmatpush1.msra.mxu0 %v367
    %369 = vmatprep.subr.mxu0 0.0
    %v370 = vand.u32 %v89, 4294901760
    %v371 = vsub.f32 %v89, %v370
    %372 = vmatpush1.msra.mxu0 %v371
    %373 = vmatprep.subr.mxu0 0.0
    %v374 = vand.u32 %v90, 4294901760
    %v375 = vsub.f32 %v90, %v374
    %376 = vmatpush1.msra.mxu0 %v375
    %377 = vmatprep.subr.mxu0 0.0
    %v378 = vand.u32 %v91, 4294901760
    %v379 = vsub.f32 %v91, %v378
    %380 = vmatpush1.msra.mxu0 %v379
    %381 = vmatprep.subr.mxu0 0.0
    %v382 = vand.u32 %v92, 4294901760
    %v383 = vsub.f32 %v92, %v382
    %384 = vmatpush1.msra.mxu0 %v383
    %385 = vmatprep.subr.mxu0 0.0
    %v386 = vand.u32 %v93, 4294901760
    %v387 = vsub.f32 %v93, %v386
    %388 = vmatpush1.msra.mxu0 %v387
    %389 = vmatprep.subr.mxu0 0.0
    %v390 = vand.u32 %v94, 4294901760
    %v391 = vsub.f32 %v94, %v390
    %392 = vmatpush1.msra.mxu0 %v391
    %393 = vmatprep.subr.mxu0 0.0
    %v394 = vand.u32 %v95, 4294901760
    %v395 = vsub.f32 %v95, %v394
    %396 = vmatpush1.msra.mxu0 %v395
    %397 = vmatprep.subr.mxu0 0.0
    %v398 = vand.u32 %v96, 4294901760
    %v399 = vsub.f32 %v96, %v398
    %400 = vmatpush1.msra.mxu0 %v399
    %401 = vmatprep.subr.mxu0 0.0
    %v402 = vand.u32 %v97, 4294901760
    %v403 = vsub.f32 %v97, %v402
    %404 = vmatpush1.msra.mxu0 %v403
    %405 = vmatprep.subr.mxu0 0.0
    %v406 = vand.u32 %v98, 4294901760
    %v407 = vsub.f32 %v98, %v406
    %408 = vmatpush1.msra.mxu0 %v407
    %409 = vmatprep.subr.mxu0 0.0
    %v410 = vand.u32 %v99, 4294901760
    %v411 = vsub.f32 %v99, %v410
    %412 = vmatpush1.msra.mxu0 %v411
    %413 = vmatprep.subr.mxu0 0.0
    %414 = vmatpush1.msra.mxu0 0.0
    %415 = vmatprep.subr.mxu0 0.0
    %416 = vmatpush1.msra.mxu0 0.0
    %417 = vmatprep.subr.mxu0 0.0
    %418 = vmatpush1.msra.mxu0 0.0
    %419 = vmatprep.subr.mxu0 0.0
    %420 = vmatpush1.msra.mxu0 0.0
    %421 = vmatprep.subr.mxu0 0.0
    %422 = vmatpush1.msra.mxu0 0.0
    %423 = vmatprep.subr.mxu0 0.0
    %424 = vmatpush1.msra.mxu0 0.0
    %425 = vmatprep.subr.mxu0 0.0
    %426 = vmatpush1.msra.mxu0 0.0
    %427 = vmatprep.subr.mxu0 0.0
    %428 = vmatpush1.msra.mxu0 0.0
    %429 = vmatprep.subr.mxu0 0.0
    %430 = vmatpush1.msra.mxu0 0.0
    %431 = vmatprep.subr.mxu0 0.0
    %432 = vmatpush1.msra.mxu0 0.0
    %433 = vmatprep.subr.mxu0 0.0
    %434 = vmatpush1.msra.mxu0 0.0
    %435 = vmatprep.subr.mxu0 0.0
    %436 = vmatpush1.msra.mxu0 0.0
    %437 = vmatprep.subr.mxu0 0.0
    %438 = vmatpush1.msra.mxu0 0.0
    %439 = vmatprep.subr.mxu0 0.0
    %440 = vmatpush1.msra.mxu0 0.0
    %441 = vmatprep.subr.mxu0 0.0
    %442 = vmatpush1.msra.mxu0 0.0
    %443 = vmatprep.subr.mxu0 0.0
    %444 = vmatpush1.msra.mxu0 0.0
    %445 = vmatprep.mubr.f32.mxu0 0.0
    %v446 = vand.u32 %v83, 4294901760
    %v447 = vsub.f32 %v83, %v446
    %448 = vmatmul.mubr.f32.gmra.mrb[0].mxu0 %v447
    %v449 = vpop.f32.mrb[0].mxu0
    %v450 = vadd.f32 %v346, %v449
    %v451 = vpop.f32.mrb[0].mxu0
    %452 = vdwg.mxu0
    %453 = vmatprep.subr.mxu0 0.0
    %v454 = vand.u32 %v84, 4294901760
    %455 = vmatpush1.msra.mxu0 %v454
    %456 = vmatprep.subr.mxu0 0.0
    %v457 = vand.u32 %v85, 4294901760
    %458 = vmatpush1.msra.mxu0 %v457
    %459 = vmatprep.subr.mxu0 0.0
    %v460 = vand.u32 %v86, 4294901760
    %461 = vmatpush1.msra.mxu0 %v460
    %462 = vmatprep.subr.mxu0 0.0
    %v463 = vand.u32 %v87, 4294901760
    %464 = vmatpush1.msra.mxu0 %v463
    %465 = vmatprep.subr.mxu0 0.0
    %v466 = vand.u32 %v88, 4294901760
    %467 = vmatpush1.msra.mxu0 %v466
    %468 = vmatprep.subr.mxu0 0.0
    %v469 = vand.u32 %v89, 4294901760
    %470 = vmatpush1.msra.mxu0 %v469
    %471 = vmatprep.subr.mxu0 0.0
    %v472 = vand.u32 %v90, 4294901760
    %473 = vmatpush1.msra.mxu0 %v472
    %474 = vmatprep.subr.mxu0 0.0
    %v475 = vand.u32 %v91, 4294901760
    %476 = vmatpush1.msra.mxu0 %v475
    %477 = vmatprep.subr.mxu0 0.0
    %v478 = vand.u32 %v92, 4294901760
    %479 = vmatpush1.msra.mxu0 %v478
    %480 = vmatprep.subr.mxu0 0.0
    %v481 = vand.u32 %v93, 4294901760
    %482 = vmatpush1.msra.mxu0 %v481
    %483 = vmatprep.subr.mxu0 0.0
    %v484 = vand.u32 %v94, 4294901760
    %485 = vmatpush1.msra.mxu0 %v484
    %486 = vmatprep.subr.mxu0 0.0
    %v487 = vand.u32 %v95, 4294901760
    %488 = vmatpush1.msra.mxu0 %v487
    %489 = vmatprep.subr.mxu0 0.0
    %v490 = vand.u32 %v96, 4294901760
    %491 = vmatpush1.msra.mxu0 %v490
    %492 = vmatprep.subr.mxu0 0.0
    %v493 = vand.u32 %v97, 4294901760
    %494 = vmatpush1.msra.mxu0 %v493
    %495 = vmatprep.subr.mxu0 0.0
    %v496 = vand.u32 %v98, 4294901760
    %497 = vmatpush1.msra.mxu0 %v496
    %498 = vmatprep.subr.mxu0 0.0
    %v499 = vand.u32 %v99, 4294901760
    %500 = vmatpush1.msra.mxu0 %v499
    %501 = vmatprep.subr.mxu0 0.0
    %502 = vmatpush1.msra.mxu0 0.0
    %503 = vmatprep.subr.mxu0 0.0
    %504 = vmatpush1.msra.mxu0 0.0
    %505 = vmatprep.subr.mxu0 0.0
    %506 = vmatpush1.msra.mxu0 0.0
    %507 = vmatprep.subr.mxu0 0.0
    %508 = vmatpush1.msra.mxu0 0.0
    %509 = vmatprep.subr.mxu0 0.0
    %510 = vmatpush1.msra.mxu0 0.0
    %511 = vmatprep.subr.mxu0 0.0
    %512 = vmatpush1.msra.mxu0 0.0
    %513 = vmatprep.subr.mxu0 0.0
    %514 = vmatpush1.msra.mxu0 0.0
    %515 = vmatprep.subr.mxu0 0.0
    %516 = vmatpush1.msra.mxu0 0.0
    %517 = vmatprep.subr.mxu0 0.0
    %518 = vmatpush1.msra.mxu0 0.0
    %519 = vmatprep.subr.mxu0 0.0
    %520 = vmatpush1.msra.mxu0 0.0
    %521 = vmatprep.subr.mxu0 0.0
    %522 = vmatpush1.msra.mxu0 0.0
    %523 = vmatprep.subr.mxu0 0.0
    %524 = vmatpush1.msra.mxu0 0.0
    %525 = vmatprep.subr.mxu0 0.0
    %526 = vmatpush1.msra.mxu0 0.0
    %527 = vmatprep.subr.mxu0 0.0
    %528 = vmatpush1.msra.mxu0 0.0
    %529 = vmatprep.subr.mxu0 0.0
    %530 = vmatpush1.msra.mxu0 0.0
    %531 = vmatprep.subr.mxu0 0.0
    %532 = vmatpush1.msra.mxu0 0.0
    %533 = vmatprep.mubr.f32.mxu0 0.0
    %v534 = vand.u32 %v83, 4294901760
    %v535 = vsub.f32 %v83, %v534
    %v536 = vand.u32 %v535, 4294901760
    %537 = vmatmul.mubr.f32.gmra.mrb[0].mxu0 %v536
    %v538 = vpop.f32.mrb[0].mxu0
    %v539 = vadd.f32 %v450, %v538
    %v540 = vpop.f32.mrb[0].mxu0
    %541 = vdwg.mxu0
    %542 = vmatprep.subr.mxu0 0.0
    %v543 = vand.u32 %v84, 4294901760
    %v544 = vsub.f32 %v84, %v543
    %v545 = vand.u32 %v544, 4294901760
    %546 = vmatpush1.msra.mxu0 %v545
    %547 = vmatprep.subr.mxu0 0.0
    %v548 = vand.u32 %v85, 4294901760
    %v549 = vsub.f32 %v85, %v548
    %v550 = vand.u32 %v549, 4294901760
    %551 = vmatpush1.msra.mxu0 %v550
    %552 = vmatprep.subr.mxu0 0.0
    %v553 = vand.u32 %v86, 4294901760
    %v554 = vsub.f32 %v86, %v553
    %v555 = vand.u32 %v554, 4294901760
    %556 = vmatpush1.msra.mxu0 %v555
    %557 = vmatprep.subr.mxu0 0.0
    %v558 = vand.u32 %v87, 4294901760
    %v559 = vsub.f32 %v87, %v558
    %v560 = vand.u32 %v559, 4294901760
    %561 = vmatpush1.msra.mxu0 %v560
    %562 = vmatprep.subr.mxu0 0.0
    %v563 = vand.u32 %v88, 4294901760
    %v564 = vsub.f32 %v88, %v563
    %v565 = vand.u32 %v564, 4294901760
    %566 = vmatpush1.msra.mxu0 %v565
    %567 = vmatprep.subr.mxu0 0.0
    %v568 = vand.u32 %v89, 4294901760
    %v569 = vsub.f32 %v89, %v568
    %v570 = vand.u32 %v569, 4294901760
    %571 = vmatpush1.msra.mxu0 %v570
    %572 = vmatprep.subr.mxu0 0.0
    %v573 = vand.u32 %v90, 4294901760
    %v574 = vsub.f32 %v90, %v573
    %v575 = vand.u32 %v574, 4294901760
    %576 = vmatpush1.msra.mxu0 %v575
    %577 = vmatprep.subr.mxu0 0.0
    %v578 = vand.u32 %v91, 4294901760
    %v579 = vsub.f32 %v91, %v578
    %v580 = vand.u32 %v579, 4294901760
    %581 = vmatpush1.msra.mxu0 %v580
    %582 = vmatprep.subr.mxu0 0.0
    %v583 = vand.u32 %v92, 4294901760
    %v584 = vsub.f32 %v92, %v583
    %v585 = vand.u32 %v584, 4294901760
    %586 = vmatpush1.msra.mxu0 %v585
    %587 = vmatprep.subr.mxu0 0.0
    %v588 = vand.u32 %v93, 4294901760
    %v589 = vsub.f32 %v93, %v588
    %v590 = vand.u32 %v589, 4294901760
    %591 = vmatpush1.msra.mxu0 %v590
    %592 = vmatprep.subr.mxu0 0.0
    %v593 = vand.u32 %v94, 4294901760
    %v594 = vsub.f32 %v94, %v593
    %v595 = vand.u32 %v594, 4294901760
    %596 = vmatpush1.msra.mxu0 %v595
    %597 = vmatprep.subr.mxu0 0.0
    %v598 = vand.u32 %v95, 4294901760
    %v599 = vsub.f32 %v95, %v598
    %v600 = vand.u32 %v599, 4294901760
    %601 = vmatpush1.msra.mxu0 %v600
    %602 = vmatprep.subr.mxu0 0.0
    %v603 = vand.u32 %v96, 4294901760
    %v604 = vsub.f32 %v96, %v603
    %v605 = vand.u32 %v604, 4294901760
    %606 = vmatpush1.msra.mxu0 %v605
    %607 = vmatprep.subr.mxu0 0.0
    %v608 = vand.u32 %v97, 4294901760
    %v609 = vsub.f32 %v97, %v608
    %v610 = vand.u32 %v609, 4294901760
    %611 = vmatpush1.msra.mxu0 %v610
    %612 = vmatprep.subr.mxu0 0.0
    %v613 = vand.u32 %v98, 4294901760
    %v614 = vsub.f32 %v98, %v613
    %v615 = vand.u32 %v614, 4294901760
    %616 = vmatpush1.msra.mxu0 %v615
    %617 = vmatprep.subr.mxu0 0.0
    %v618 = vand.u32 %v99, 4294901760
    %v619 = vsub.f32 %v99, %v618
    %v620 = vand.u32 %v619, 4294901760
    %621 = vmatpush1.msra.mxu0 %v620
    %622 = vmatprep.subr.mxu0 0.0
    %623 = vmatpush1.msra.mxu0 0.0
    %624 = vmatprep.subr.mxu0 0.0
    %625 = vmatpush1.msra.mxu0 0.0
    %626 = vmatprep.subr.mxu0 0.0
    %627 = vmatpush1.msra.mxu0 0.0
    %628 = vmatprep.subr.mxu0 0.0
    %629 = vmatpush1.msra.mxu0 0.0
    %630 = vmatprep.subr.mxu0 0.0
    %631 = vmatpush1.msra.mxu0 0.0
    %632 = vmatprep.subr.mxu0 0.0
    %633 = vmatpush1.msra.mxu0 0.0
    %634 = vmatprep.subr.mxu0 0.0
    %635 = vmatpush1.msra.mxu0 0.0
    %636 = vmatprep.subr.mxu0 0.0
    %637 = vmatpush1.msra.mxu0 0.0
    %638 = vmatprep.subr.mxu0 0.0
    %639 = vmatpush1.msra.mxu0 0.0
    %640 = vmatprep.subr.mxu0 0.0
    %641 = vmatpush1.msra.mxu0 0.0
    %642 = vmatprep.subr.mxu0 0.0
    %643 = vmatpush1.msra.mxu0 0.0
    %644 = vmatprep.subr.mxu0 0.0
    %645 = vmatpush1.msra.mxu0 0.0
    %646 = vmatprep.subr.mxu0 0.0
    %647 = vmatpush1.msra.mxu0 0.0
    %648 = vmatprep.subr.mxu0 0.0
    %649 = vmatpush1.msra.mxu0 0.0
    %650 = vmatprep.subr.mxu0 0.0
    %651 = vmatpush1.msra.mxu0 0.0
    %652 = vmatprep.subr.mxu0 0.0
    %653 = vmatpush1.msra.mxu0 0.0
    %654 = vmatprep.mubr.f32.mxu0 0.0
    %v655 = vand.u32 %v83, 4294901760
    %656 = vmatmul.mubr.f32.gmra.mrb[0].mxu0 %v655
    %v657 = vpop.f32.mrb[0].mxu0
    %v658 = vadd.f32 %v539, %v657
    %v659 = vpop.f32.mrb[0].mxu0
    %660 = vdwg.mxu0
    %661 = vmatprep.subr.mxu0 0.0
    %v662 = vand.u32 %v84, 4294901760
    %663 = vmatpush1.msra.mxu0 %v662
    %664 = vmatprep.subr.mxu0 0.0
    %v665 = vand.u32 %v85, 4294901760
    %666 = vmatpush1.msra.mxu0 %v665
    %667 = vmatprep.subr.mxu0 0.0
    %v668 = vand.u32 %v86, 4294901760
    %669 = vmatpush1.msra.mxu0 %v668
    %670 = vmatprep.subr.mxu0 0.0
    %v671 = vand.u32 %v87, 4294901760
    %672 = vmatpush1.msra.mxu0 %v671
    %673 = vmatprep.subr.mxu0 0.0
    %v674 = vand.u32 %v88, 4294901760
    %675 = vmatpush1.msra.mxu0 %v674
    %676 = vmatprep.subr.mxu0 0.0
    %v677 = vand.u32 %v89, 4294901760
    %678 = vmatpush1.msra.mxu0 %v677
    %679 = vmatprep.subr.mxu0 0.0
    %v680 = vand.u32 %v90, 4294901760
    %681 = vmatpush1.msra.mxu0 %v680
    %682 = vmatprep.subr.mxu0 0.0
    %v683 = vand.u32 %v91, 4294901760
    %684 = vmatpush1.msra.mxu0 %v683
    %685 = vmatprep.subr.mxu0 0.0
    %v686 = vand.u32 %v92, 4294901760
    %687 = vmatpush1.msra.mxu0 %v686
    %688 = vmatprep.subr.mxu0 0.0
    %v689 = vand.u32 %v93, 4294901760
    %690 = vmatpush1.msra.mxu0 %v689
    %691 = vmatprep.subr.mxu0 0.0
    %v692 = vand.u32 %v94, 4294901760
    %693 = vmatpush1.msra.mxu0 %v692
    %694 = vmatprep.subr.mxu0 0.0
    %v695 = vand.u32 %v95, 4294901760
    %696 = vmatpush1.msra.mxu0 %v695
    %697 = vmatprep.subr.mxu0 0.0
    %v698 = vand.u32 %v96, 4294901760
    %699 = vmatpush1.msra.mxu0 %v698
    %700 = vmatprep.subr.mxu0 0.0
    %v701 = vand.u32 %v97, 4294901760
    %702 = vmatpush1.msra.mxu0 %v701
    %703 = vmatprep.subr.mxu0 0.0
    %v704 = vand.u32 %v98, 4294901760
    %705 = vmatpush1.msra.mxu0 %v704
    %706 = vmatprep.subr.mxu0 0.0
    %v707 = vand.u32 %v99, 4294901760
    %708 = vmatpush1.msra.mxu0 %v707
    %709 = vmatprep.subr.mxu0 0.0
    %710 = vmatpush1.msra.mxu0 0.0
    %711 = vmatprep.subr.mxu0 0.0
    %712 = vmatpush1.msra.mxu0 0.0
    %713 = vmatprep.subr.mxu0 0.0
    %714 = vmatpush1.msra.mxu0 0.0
    %715 = vmatprep.subr.mxu0 0.0
    %716 = vmatpush1.msra.mxu0 0.0
    %717 = vmatprep.subr.mxu0 0.0
    %718 = vmatpush1.msra.mxu0 0.0
    %719 = vmatprep.subr.mxu0 0.0
    %720 = vmatpush1.msra.mxu0 0.0
    %721 = vmatprep.subr.mxu0 0.0
    %722 = vmatpush1.msra.mxu0 0.0
    %723 = vmatprep.subr.mxu0 0.0
    %724 = vmatpush1.msra.mxu0 0.0
    %725 = vmatprep.subr.mxu0 0.0
    %726 = vmatpush1.msra.mxu0 0.0
    %727 = vmatprep.subr.mxu0 0.0
    %728 = vmatpush1.msra.mxu0 0.0
    %729 = vmatprep.subr.mxu0 0.0
    %730 = vmatpush1.msra.mxu0 0.0
    %731 = vmatprep.subr.mxu0 0.0
    %732 = vmatpush1.msra.mxu0 0.0
    %733 = vmatprep.subr.mxu0 0.0
    %734 = vmatpush1.msra.mxu0 0.0
    %735 = vmatprep.subr.mxu0 0.0
    %736 = vmatpush1.msra.mxu0 0.0
    %737 = vmatprep.subr.mxu0 0.0
    %738 = vmatpush1.msra.mxu0 0.0
    %739 = vmatprep.subr.mxu0 0.0
    %740 = vmatpush1.msra.mxu0 0.0
    %741 = vmatprep.mubr.f32.mxu0 0.0
    %v742 = vand.u32 %v83, 4294901760
    %743 = vmatmul.mubr.f32.gmra.mrb[0].mxu0 %v742
    %v744 = vpop.f32.mrb[0].mxu0
    %v745 = vadd.f32 %v658, %v744
    %v746 = vpop.f32.mrb[0].mxu0
    %747 = vdwg.mxu0
    %v748 = vld [vmem:[#allocation8] sm:$0xff]
    %v749 = vld [vmem:[#allocation8 + $0x8] sm:$0xff]
    %v750 = vld [vmem:[#allocation8 + $0x10] sm:$0xff]
    %v751 = vld [vmem:[#allocation8 + $0x18] sm:$0xff]
    %v752 = vld [vmem:[#allocation8 + $0x20] sm:$0xff]
    %v753 = vld [vmem:[#allocation8 + $0x28] sm:$0xff]
    %v754 = vld [vmem:[#allocation8 + $0x30] sm:$0xff]
    %v755 = vld [vmem:[#allocation8 + $0x38] sm:$0xff]
    %v756 = vld [vmem:[#allocation8 + $0x40] sm:$0xff]
    %v757 = vld [vmem:[#allocation8 + $0x48] sm:$0xff]
    %v758 = vld [vmem:[#allocation8 + $0x50] sm:$0xff]
    %v759 = vld [vmem:[#allocation8 + $0x58] sm:$0xff]
    %v760 = vld [vmem:[#allocation8 + $0x60] sm:$0xff]
    %v761 = vld [vmem:[#allocation8 + $0x68] sm:$0xff]
    %v762 = vld [vmem:[#allocation8 + $0x70] sm:$0xff]
    %v763 = vld [vmem:[#allocation8 + $0x78] sm:$0xff]
    %v764 = vld [vmem:[#allocation10] sm:$0x1]
    %v766 = vlaneseq
    %v767 = vshrl.u32 %v766, 7
    %v768 = vsub.s32 0, %v767
    %v769 = vrot.slane %v764, %v768
    %771 = vmatprep.subr.mxu0 0.0
    %v772 = vand.u32 %v748, 4294901760
    %773 = vmatpush1.msra.mxu0 %v772
    %774 = vmatprep.subr.mxu0 0.0
    %v775 = vand.u32 %v749, 4294901760
    %776 = vmatpush1.msra.mxu0 %v775
    %777 = vmatprep.subr.mxu0 0.0
    %v778 = vand.u32 %v750, 4294901760
    %779 = vmatpush1.msra.mxu0 %v778
    %780 = vmatprep.subr.mxu0 0.0
    %v781 = vand.u32 %v751, 4294901760
    %782 = vmatpush1.msra.mxu0 %v781
    %783 = vmatprep.subr.mxu0 0.0
    %v784 = vand.u32 %v752, 4294901760
    %785 = vmatpush1.msra.mxu0 %v784
    %786 = vmatprep.subr.mxu0 0.0
    %v787 = vand.u32 %v753, 4294901760
    %788 = vmatpush1.msra.mxu0 %v787
    %789 = vmatprep.subr.mxu0 0.0
    %v790 = vand.u32 %v754, 4294901760
    %791 = vmatpush1.msra.mxu0 %v790
    %792 = vmatprep.subr.mxu0 0.0
    %v793 = vand.u32 %v755, 4294901760
    %794 = vmatpush1.msra.mxu0 %v793
    %795 = vmatprep.subr.mxu0 0.0
    %v796 = vand.u32 %v756, 4294901760
    %797 = vmatpush1.msra.mxu0 %v796
    %798 = vmatprep.subr.mxu0 0.0
    %v799 = vand.u32 %v757, 4294901760
    %800 = vmatpush1.msra.mxu0 %v799
    %801 = vmatprep.subr.mxu0 0.0
    %v802 = vand.u32 %v758, 4294901760
    %803 = vmatpush1.msra.mxu0 %v802
    %804 = vmatprep.subr.mxu0 0.0
    %v805 = vand.u32 %v759, 4294901760
    %806 = vmatpush1.msra.mxu0 %v805
    %807 = vmatprep.subr.mxu0 0.0
    %v808 = vand.u32 %v760, 4294901760
    %809 = vmatpush1.msra.mxu0 %v808
    %810 = vmatprep.subr.mxu0 0.0
    %v811 = vand.u32 %v761, 4294901760
    %812 = vmatpush1.msra.mxu0 %v811
    %813 = vmatprep.subr.mxu0 0.0
    %v814 = vand.u32 %v762, 4294901760
    %815 = vmatpush1.msra.mxu0 %v814
    %816 = vmatprep.subr.mxu0 0.0
    %v817 = vand.u32 %v763, 4294901760
    %818 = vmatpush1.msra.mxu0 %v817
    %819 = vmatprep.subr.mxu0 0.0
    %820 = vmatpush1.msra.mxu0 0.0
    %821 = vmatprep.subr.mxu0 0.0
    %822 = vmatpush1.msra.mxu0 0.0
    %823 = vmatprep.subr.mxu0 0.0
    %824 = vmatpush1.msra.mxu0 0.0
    %825 = vmatprep.subr.mxu0 0.0
    %826 = vmatpush1.msra.mxu0 0.0
    %827 = vmatprep.subr.mxu0 0.0
    %828 = vmatpush1.msra.mxu0 0.0
    %829 = vmatprep.subr.mxu0 0.0
    %830 = vmatpush1.msra.mxu0 0.0
    %831 = vmatprep.subr.mxu0 0.0
    %832 = vmatpush1.msra.mxu0 0.0
    %833 = vmatprep.subr.mxu0 0.0
    %834 = vmatpush1.msra.mxu0 0.0
    %835 = vmatprep.subr.mxu0 0.0
    %836 = vmatpush1.msra.mxu0 0.0
    %837 = vmatprep.subr.mxu0 0.0
    %838 = vmatpush1.msra.mxu0 0.0
    %839 = vmatprep.subr.mxu0 0.0
    %840 = vmatpush1.msra.mxu0 0.0
    %841 = vmatprep.subr.mxu0 0.0
    %842 = vmatpush1.msra.mxu0 0.0
    %843 = vmatprep.subr.mxu0 0.0
    %844 = vmatpush1.msra.mxu0 0.0
    %845 = vmatprep.subr.mxu0 0.0
    %846 = vmatpush1.msra.mxu0 0.0
    %847 = vmatprep.subr.mxu0 0.0
    %848 = vmatpush1.msra.mxu0 0.0
    %849 = vmatprep.subr.mxu0 0.0
    %850 = vmatpush1.msra.mxu0 0.0
    %851 = vmatprep.mubr.f32.mxu0 0.0
    %v852 = vand.u32 %v745, 4294901760
    %v853 = vsub.f32 %v745, %v852
    %v854 = vand.u32 %v853, 4294901760
    %v855 = vsub.f32 %v853, %v854
    %v856 = vand.u32 %v855, 4294901760
    %857 = vmatmul.mubr.f32.gmra.mrb[0].mxu0 %v856
    %v858 = vpop.f32.mrb[0].mxu0
    %v859 = vadd.f32 %v769, %v858
    %v860 = vpop.f32.mrb[0].mxu0
    %861 = vdwg.mxu0
    %862 = vmatprep.subr.mxu0 0.0
    %v863 = vand.u32 %v748, 4294901760
    %v864 = vsub.f32 %v748, %v863
    %v865 = vand.u32 %v864, 4294901760
    %v866 = vsub.f32 %v864, %v865
    %v867 = vand.u32 %v866, 4294901760
    %868 = vmatpush1.msra.mxu0 %v867
    %869 = vmatprep.subr.mxu0 0.0
    %v870 = vand.u32 %v749, 4294901760
    %v871 = vsub.f32 %v749, %v870
    %v872 = vand.u32 %v871, 4294901760
    %v873 = vsub.f32 %v871, %v872
    %v874 = vand.u32 %v873, 4294901760
    %875 = vmatpush1.msra.mxu0 %v874
    %876 = vmatprep.subr.mxu0 0.0
    %v877 = vand.u32 %v750, 4294901760
    %v878 = vsub.f32 %v750, %v877
    %v879 = vand.u32 %v878, 4294901760
    %v880 = vsub.f32 %v878, %v879
    %v881 = vand.u32 %v880, 4294901760
    %882 = vmatpush1.msra.mxu0 %v881
    %883 = vmatprep.subr.mxu0 0.0
    %v884 = vand.u32 %v751, 4294901760
    %v885 = vsub.f32 %v751, %v884
    %v886 = vand.u32 %v885, 4294901760
    %v887 = vsub.f32 %v885, %v886
    %v888 = vand.u32 %v887, 4294901760
    %889 = vmatpush1.msra.mxu0 %v888
    %890 = vmatprep.subr.mxu0 0.0
    %v891 = vand.u32 %v752, 4294901760
    %v892 = vsub.f32 %v752, %v891
    %v893 = vand.u32 %v892, 4294901760
    %v894 = vsub.f32 %v892, %v893
    %v895 = vand.u32 %v894, 4294901760
    %896 = vmatpush1.msra.mxu0 %v895
    %897 = vmatprep.subr.mxu0 0.0
    %v898 = vand.u32 %v753, 4294901760
    %v899 = vsub.f32 %v753, %v898
    %v900 = vand.u32 %v899, 4294901760
    %v901 = vsub.f32 %v899, %v900
    %v902 = vand.u32 %v901, 4294901760
    %903 = vmatpush1.msra.mxu0 %v902
    %904 = vmatprep.subr.mxu0 0.0
    %v905 = vand.u32 %v754, 4294901760
    %v906 = vsub.f32 %v754, %v905
    %v907 = vand.u32 %v906, 4294901760
    %v908 = vsub.f32 %v906, %v907
    %v909 = vand.u32 %v908, 4294901760
    %910 = vmatpush1.msra.mxu0 %v909
    %911 = vmatprep.subr.mxu0 0.0
    %v912 = vand.u32 %v755, 4294901760
    %v913 = vsub.f32 %v755, %v912
    %v914 = vand.u32 %v913, 4294901760
    %v915 = vsub.f32 %v913, %v914
    %v916 = vand.u32 %v915, 4294901760
    %917 = vmatpush1.msra.mxu0 %v916
    %918 = vmatprep.subr.mxu0 0.0
    %v919 = vand.u32 %v756, 4294901760
    %v920 = vsub.f32 %v756, %v919
    %v921 = vand.u32 %v920, 4294901760
    %v922 = vsub.f32 %v920, %v921
    %v923 = vand.u32 %v922, 4294901760
    %924 = vmatpush1.msra.mxu0 %v923
    %925 = vmatprep.subr.mxu0 0.0
    %v926 = vand.u32 %v757, 4294901760
    %v927 = vsub.f32 %v757, %v926
    %v928 = vand.u32 %v927, 4294901760
    %v929 = vsub.f32 %v927, %v928
    %v930 = vand.u32 %v929, 4294901760
    %931 = vmatpush1.msra.mxu0 %v930
    %932 = vmatprep.subr.mxu0 0.0
    %v933 = vand.u32 %v758, 4294901760
    %v934 = vsub.f32 %v758, %v933
    %v935 = vand.u32 %v934, 4294901760
    %v936 = vsub.f32 %v934, %v935
    %v937 = vand.u32 %v936, 4294901760
    %938 = vmatpush1.msra.mxu0 %v937
    %939 = vmatprep.subr.mxu0 0.0
    %v940 = vand.u32 %v759, 4294901760
    %v941 = vsub.f32 %v759, %v940
    %v942 = vand.u32 %v941, 4294901760
    %v943 = vsub.f32 %v941, %v942
    %v944 = vand.u32 %v943, 4294901760
    %945 = vmatpush1.msra.mxu0 %v944
    %946 = vmatprep.subr.mxu0 0.0
    %v947 = vand.u32 %v760, 4294901760
    %v948 = vsub.f32 %v760, %v947
    %v949 = vand.u32 %v948, 4294901760
    %v950 = vsub.f32 %v948, %v949
    %v951 = vand.u32 %v950, 4294901760
    %952 = vmatpush1.msra.mxu0 %v951
    %953 = vmatprep.subr.mxu0 0.0
    %v954 = vand.u32 %v761, 4294901760
    %v955 = vsub.f32 %v761, %v954
    %v956 = vand.u32 %v955, 4294901760
    %v957 = vsub.f32 %v955, %v956
    %v958 = vand.u32 %v957, 4294901760
    %959 = vmatpush1.msra.mxu0 %v958
    %960 = vmatprep.subr.mxu0 0.0
    %v961 = vand.u32 %v762, 4294901760
    %v962 = vsub.f32 %v762, %v961
    %v963 = vand.u32 %v962, 4294901760
    %v964 = vsub.f32 %v962, %v963
    %v965 = vand.u32 %v964, 4294901760
    %966 = vmatpush1.msra.mxu0 %v965
    %967 = vmatprep.subr.mxu0 0.0
    %v968 = vand.u32 %v763, 4294901760
    %v969 = vsub.f32 %v763, %v968
    %v970 = vand.u32 %v969, 4294901760
    %v971 = vsub.f32 %v969, %v970
    %v972 = vand.u32 %v971, 4294901760
    %973 = vmatpush1.msra.mxu0 %v972
    %974 = vmatprep.subr.mxu0 0.0
    %975 = vmatpush1.msra.mxu0 0.0
    %976 = vmatprep.subr.mxu0 0.0
    %977 = vmatpush1.msra.mxu0 0.0
    %978 = vmatprep.subr.mxu0 0.0
    %979 = vmatpush1.msra.mxu0 0.0
    %980 = vmatprep.subr.mxu0 0.0
    %981 = vmatpush1.msra.mxu0 0.0
    %982 = vmatprep.subr.mxu0 0.0
    %983 = vmatpush1.msra.mxu0 0.0
    %984 = vmatprep.subr.mxu0 0.0
    %985 = vmatpush1.msra.mxu0 0.0
    %986 = vmatprep.subr.mxu0 0.0
    %987 = vmatpush1.msra.mxu0 0.0
    %988 = vmatprep.subr.mxu0 0.0
    %989 = vmatpush1.msra.mxu0 0.0
    %990 = vmatprep.subr.mxu0 0.0
    %991 = vmatpush1.msra.mxu0 0.0
    %992 = vmatprep.subr.mxu0 0.0
    %993 = vmatpush1.msra.mxu0 0.0
    %994 = vmatprep.subr.mxu0 0.0
    %995 = vmatpush1.msra.mxu0 0.0
    %996 = vmatprep.subr.mxu0 0.0
    %997 = vmatpush1.msra.mxu0 0.0
    %998 = vmatprep.subr.mxu0 0.0
    %999 = vmatpush1.msra.mxu0 0.0
    %1000 = vmatprep.subr.mxu0 0.0
    %1001 = vmatpush1.msra.mxu0 0.0
    %1002 = vmatprep.subr.mxu0 0.0
    %1003 = vmatpush1.msra.mxu0 0.0
    %1004 = vmatprep.subr.mxu0 0.0
    %1005 = vmatpush1.msra.mxu0 0.0
    %1006 = vmatprep.mubr.f32.mxu0 0.0
    %v1007 = vand.u32 %v745, 4294901760
    %1008 = vmatmul.mubr.f32.gmra.mrb[0].mxu0 %v1007
    %v1009 = vpop.f32.mrb[0].mxu0
    %v1010 = vadd.f32 %v859, %v1009
    %v1011 = vpop.f32.mrb[0].mxu0
    %1012 = vdwg.mxu0
    %1013 = vmatprep.subr.mxu0 0.0
    %v1014 = vand.u32 %v748, 4294901760
    %v1015 = vsub.f32 %v748, %v1014
    %1016 = vmatpush1.msra.mxu0 %v1015
    %1017 = vmatprep.subr.mxu0 0.0
    %v1018 = vand.u32 %v749, 4294901760
    %v1019 = vsub.f32 %v749, %v1018
    %1020 = vmatpush1.msra.mxu0 %v1019
    %1021 = vmatprep.subr.mxu0 0.0
    %v1022 = vand.u32 %v750, 4294901760
    %v1023 = vsub.f32 %v750, %v1022
    %1024 = vmatpush1.msra.mxu0 %v1023
    %1025 = vmatprep.subr.mxu0 0.0
    %v1026 = vand.u32 %v751, 4294901760
    %v1027 = vsub.f32 %v751, %v1026
    %1028 = vmatpush1.msra.mxu0 %v1027
    %1029 = vmatprep.subr.mxu0 0.0
    %v1030 = vand.u32 %v752, 4294901760
    %v1031 = vsub.f32 %v752, %v1030
    %1032 = vmatpush1.msra.mxu0 %v1031
    %1033 = vmatprep.subr.mxu0 0.0
    %v1034 = vand.u32 %v753, 4294901760
    %v1035 = vsub.f32 %v753, %v1034
    %1036 = vmatpush1.msra.mxu0 %v1035
    %1037 = vmatprep.subr.mxu0 0.0
    %v1038 = vand.u32 %v754, 4294901760
    %v1039 = vsub.f32 %v754, %v1038
    %1040 = vmatpush1.msra.mxu0 %v1039
    %1041 = vmatprep.subr.mxu0 0.0
    %v1042 = vand.u32 %v755, 4294901760
    %v1043 = vsub.f32 %v755, %v1042
    %1044 = vmatpush1.msra.mxu0 %v1043
    %1045 = vmatprep.subr.mxu0 0.0
    %v1046 = vand.u32 %v756, 4294901760
    %v1047 = vsub.f32 %v756, %v1046
    %1048 = vmatpush1.msra.mxu0 %v1047
    %1049 = vmatprep.subr.mxu0 0.0
    %v1050 = vand.u32 %v757, 4294901760
    %v1051 = vsub.f32 %v757, %v1050
    %1052 = vmatpush1.msra.mxu0 %v1051
    %1053 = vmatprep.subr.mxu0 0.0
    %v1054 = vand.u32 %v758, 4294901760
    %v1055 = vsub.f32 %v758, %v1054
    %1056 = vmatpush1.msra.mxu0 %v1055
    %1057 = vmatprep.subr.mxu0 0.0
    %v1058 = vand.u32 %v759, 4294901760
    %v1059 = vsub.f32 %v759, %v1058
    %1060 = vmatpush1.msra.mxu0 %v1059
    %1061 = vmatprep.subr.mxu0 0.0
    %v1062 = vand.u32 %v760, 4294901760
    %v1063 = vsub.f32 %v760, %v1062
    %1064 = vmatpush1.msra.mxu0 %v1063
    %1065 = vmatprep.subr.mxu0 0.0
    %v1066 = vand.u32 %v761, 4294901760
    %v1067 = vsub.f32 %v761, %v1066
    %1068 = vmatpush1.msra.mxu0 %v1067
    %1069 = vmatprep.subr.mxu0 0.0
    %v1070 = vand.u32 %v762, 4294901760
    %v1071 = vsub.f32 %v762, %v1070
    %1072 = vmatpush1.msra.mxu0 %v1071
    %1073 = vmatprep.subr.mxu0 0.0
    %v1074 = vand.u32 %v763, 4294901760
    %v1075 = vsub.f32 %v763, %v1074
    %1076 = vmatpush1.msra.mxu0 %v1075
    %1077 = vmatprep.subr.mxu0 0.0
    %1078 = vmatpush1.msra.mxu0 0.0
    %1079 = vmatprep.subr.mxu0 0.0
    %1080 = vmatpush1.msra.mxu0 0.0
    %1081 = vmatprep.subr.mxu0 0.0
    %1082 = vmatpush1.msra.mxu0 0.0
    %1083 = vmatprep.subr.mxu0 0.0
    %1084 = vmatpush1.msra.mxu0 0.0
    %1085 = vmatprep.subr.mxu0 0.0
    %1086 = vmatpush1.msra.mxu0 0.0
    %1087 = vmatprep.subr.mxu0 0.0
    %1088 = vmatpush1.msra.mxu0 0.0
    %1089 = vmatprep.subr.mxu0 0.0
    %1090 = vmatpush1.msra.mxu0 0.0
    %1091 = vmatprep.subr.mxu0 0.0
    %1092 = vmatpush1.msra.mxu0 0.0
    %1093 = vmatprep.subr.mxu0 0.0
    %1094 = vmatpush1.msra.mxu0 0.0
    %1095 = vmatprep.subr.mxu0 0.0
    %1096 = vmatpush1.msra.mxu0 0.0
    %1097 = vmatprep.subr.mxu0 0.0
    %1098 = vmatpush1.msra.mxu0 0.0
    %1099 = vmatprep.subr.mxu0 0.0
    %1100 = vmatpush1.msra.mxu0 0.0
    %1101 = vmatprep.subr.mxu0 0.0
    %1102 = vmatpush1.msra.mxu0 0.0
    %1103 = vmatprep.subr.mxu0 0.0
    %1104 = vmatpush1.msra.mxu0 0.0
    %1105 = vmatprep.subr.mxu0 0.0
    %1106 = vmatpush1.msra.mxu0 0.0
    %1107 = vmatprep.subr.mxu0 0.0
    %1108 = vmatpush1.msra.mxu0 0.0
    %1109 = vmatprep.mubr.f32.mxu0 0.0
    %v1110 = vand.u32 %v745, 4294901760
    %v1111 = vsub.f32 %v745, %v1110
    %1112 = vmatmul.mubr.f32.gmra.mrb[0].mxu0 %v1111
    %v1113 = vpop.f32.mrb[0].mxu0
    %v1114 = vadd.f32 %v1010, %v1113
    %v1115 = vpop.f32.mrb[0].mxu0
    %1116 = vdwg.mxu0
    %1117 = vmatprep.subr.mxu0 0.0
    %v1118 = vand.u32 %v748, 4294901760
    %1119 = vmatpush1.msra.mxu0 %v1118
    %1120 = vmatprep.subr.mxu0 0.0
    %v1121 = vand.u32 %v749, 4294901760
    %1122 = vmatpush1.msra.mxu0 %v1121
    %1123 = vmatprep.subr.mxu0 0.0
    %v1124 = vand.u32 %v750, 4294901760
    %1125 = vmatpush1.msra.mxu0 %v1124
    %1126 = vmatprep.subr.mxu0 0.0
    %v1127 = vand.u32 %v751, 4294901760
    %1128 = vmatpush1.msra.mxu0 %v1127
    %1129 = vmatprep.subr.mxu0 0.0
    %v1130 = vand.u32 %v752, 4294901760
    %1131 = vmatpush1.msra.mxu0 %v1130
    %1132 = vmatprep.subr.mxu0 0.0
    %v1133 = vand.u32 %v753, 4294901760
    %1134 = vmatpush1.msra.mxu0 %v1133
    %1135 = vmatprep.subr.mxu0 0.0
    %v1136 = vand.u32 %v754, 4294901760
    %1137 = vmatpush1.msra.mxu0 %v1136
    %1138 = vmatprep.subr.mxu0 0.0
    %v1139 = vand.u32 %v755, 4294901760
    %1140 = vmatpush1.msra.mxu0 %v1139
    %1141 = vmatprep.subr.mxu0 0.0
    %v1142 = vand.u32 %v756, 4294901760
    %1143 = vmatpush1.msra.mxu0 %v1142
    %1144 = vmatprep.subr.mxu0 0.0
    %v1145 = vand.u32 %v757, 4294901760
    %1146 = vmatpush1.msra.mxu0 %v1145
    %1147 = vmatprep.subr.mxu0 0.0
    %v1148 = vand.u32 %v758, 4294901760
    %1149 = vmatpush1.msra.mxu0 %v1148
    %1150 = vmatprep.subr.mxu0 0.0
    %v1151 = vand.u32 %v759, 4294901760
    %1152 = vmatpush1.msra.mxu0 %v1151
    %1153 = vmatprep.subr.mxu0 0.0
    %v1154 = vand.u32 %v760, 4294901760
    %1155 = vmatpush1.msra.mxu0 %v1154
    %1156 = vmatprep.subr.mxu0 0.0
    %v1157 = vand.u32 %v761, 4294901760
    %1158 = vmatpush1.msra.mxu0 %v1157
    %1159 = vmatprep.subr.mxu0 0.0
    %v1160 = vand.u32 %v762, 4294901760
    %1161 = vmatpush1.msra.mxu0 %v1160
    %1162 = vmatprep.subr.mxu0 0.0
    %v1163 = vand.u32 %v763, 4294901760
    %1164 = vmatpush1.msra.mxu0 %v1163
    %1165 = vmatprep.subr.mxu0 0.0
    %1166 = vmatpush1.msra.mxu0 0.0
    %1167 = vmatprep.subr.mxu0 0.0
    %1168 = vmatpush1.msra.mxu0 0.0
    %1169 = vmatprep.subr.mxu0 0.0
    %1170 = vmatpush1.msra.mxu0 0.0
    %1171 = vmatprep.subr.mxu0 0.0
    %1172 = vmatpush1.msra.mxu0 0.0
    %1173 = vmatprep.subr.mxu0 0.0
    %1174 = vmatpush1.msra.mxu0 0.0
    %1175 = vmatprep.subr.mxu0 0.0
    %1176 = vmatpush1.msra.mxu0 0.0
    %1177 = vmatprep.subr.mxu0 0.0
    %1178 = vmatpush1.msra.mxu0 0.0
    %1179 = vmatprep.subr.mxu0 0.0
    %1180 = vmatpush1.msra.mxu0 0.0
    %1181 = vmatprep.subr.mxu0 0.0
    %1182 = vmatpush1.msra.mxu0 0.0
    %1183 = vmatprep.subr.mxu0 0.0
    %1184 = vmatpush1.msra.mxu0 0.0
    %1185 = vmatprep.subr.mxu0 0.0
    %1186 = vmatpush1.msra.mxu0 0.0
    %1187 = vmatprep.subr.mxu0 0.0
    %1188 = vmatpush1.msra.mxu0 0.0
    %1189 = vmatprep.subr.mxu0 0.0
    %1190 = vmatpush1.msra.mxu0 0.0
    %1191 = vmatprep.subr.mxu0 0.0
    %1192 = vmatpush1.msra.mxu0 0.0
    %1193 = vmatprep.subr.mxu0 0.0
    %1194 = vmatpush1.msra.mxu0 0.0
    %1195 = vmatprep.subr.mxu0 0.0
    %1196 = vmatpush1.msra.mxu0 0.0
    %1197 = vmatprep.mubr.f32.mxu0 0.0
    %v1198 = vand.u32 %v745, 4294901760
    %v1199 = vsub.f32 %v745, %v1198
    %v1200 = vand.u32 %v1199, 4294901760
    %1201 = vmatmul.mubr.f32.gmra.mrb[0].mxu0 %v1200
    %v1202 = vpop.f32.mrb[0].mxu0
    %v1203 = vadd.f32 %v1114, %v1202
    %v1204 = vpop.f32.mrb[0].mxu0
    %1205 = vdwg.mxu0
    %1206 = vmatprep.subr.mxu0 0.0
    %v1207 = vand.u32 %v748, 4294901760
    %v1208 = vsub.f32 %v748, %v1207
    %v1209 = vand.u32 %v1208, 4294901760
    %1210 = vmatpush1.msra.mxu0 %v1209
    %1211 = vmatprep.subr.mxu0 0.0
    %v1212 = vand.u32 %v749, 4294901760
    %v1213 = vsub.f32 %v749, %v1212
    %v1214 = vand.u32 %v1213, 4294901760
    %1215 = vmatpush1.msra.mxu0 %v1214
    %1216 = vmatprep.subr.mxu0 0.0
    %v1217 = vand.u32 %v750, 4294901760
    %v1218 = vsub.f32 %v750, %v1217
    %v1219 = vand.u32 %v1218, 4294901760
    %1220 = vmatpush1.msra.mxu0 %v1219
    %1221 = vmatprep.subr.mxu0 0.0
    %v1222 = vand.u32 %v751, 4294901760
    %v1223 = vsub.f32 %v751, %v1222
    %v1224 = vand.u32 %v1223, 4294901760
    %1225 = vmatpush1.msra.mxu0 %v1224
    %1226 = vmatprep.subr.mxu0 0.0
    %v1227 = vand.u32 %v752, 4294901760
    %v1228 = vsub.f32 %v752, %v1227
    %v1229 = vand.u32 %v1228, 4294901760
    %1230 = vmatpush1.msra.mxu0 %v1229
    %1231 = vmatprep.subr.mxu0 0.0
    %v1232 = vand.u32 %v753, 4294901760
    %v1233 = vsub.f32 %v753, %v1232
    %v1234 = vand.u32 %v1233, 4294901760
    %1235 = vmatpush1.msra.mxu0 %v1234
    %1236 = vmatprep.subr.mxu0 0.0
    %v1237 = vand.u32 %v754, 4294901760
    %v1238 = vsub.f32 %v754, %v1237
    %v1239 = vand.u32 %v1238, 4294901760
    %1240 = vmatpush1.msra.mxu0 %v1239
    %1241 = vmatprep.subr.mxu0 0.0
    %v1242 = vand.u32 %v755, 4294901760
    %v1243 = vsub.f32 %v755, %v1242
    %v1244 = vand.u32 %v1243, 4294901760
    %1245 = vmatpush1.msra.mxu0 %v1244
    %1246 = vmatprep.subr.mxu0 0.0
    %v1247 = vand.u32 %v756, 4294901760
    %v1248 = vsub.f32 %v756, %v1247
    %v1249 = vand.u32 %v1248, 4294901760
    %1250 = vmatpush1.msra.mxu0 %v1249
    %1251 = vmatprep.subr.mxu0 0.0
    %v1252 = vand.u32 %v757, 4294901760
    %v1253 = vsub.f32 %v757, %v1252
    %v1254 = vand.u32 %v1253, 4294901760
    %1255 = vmatpush1.msra.mxu0 %v1254
    %1256 = vmatprep.subr.mxu0 0.0
    %v1257 = vand.u32 %v758, 4294901760
    %v1258 = vsub.f32 %v758, %v1257
    %v1259 = vand.u32 %v1258, 4294901760
    %1260 = vmatpush1.msra.mxu0 %v1259
    %1261 = vmatprep.subr.mxu0 0.0
    %v1262 = vand.u32 %v759, 4294901760
    %v1263 = vsub.f32 %v759, %v1262
    %v1264 = vand.u32 %v1263, 4294901760
    %1265 = vmatpush1.msra.mxu0 %v1264
    %1266 = vmatprep.subr.mxu0 0.0
    %v1267 = vand.u32 %v760, 4294901760
    %v1268 = vsub.f32 %v760, %v1267
    %v1269 = vand.u32 %v1268, 4294901760
    %1270 = vmatpush1.msra.mxu0 %v1269
    %1271 = vmatprep.subr.mxu0 0.0
    %v1272 = vand.u32 %v761, 4294901760
    %v1273 = vsub.f32 %v761, %v1272
    %v1274 = vand.u32 %v1273, 4294901760
    %1275 = vmatpush1.msra.mxu0 %v1274
    %1276 = vmatprep.subr.mxu0 0.0
    %v1277 = vand.u32 %v762, 4294901760
    %v1278 = vsub.f32 %v762, %v1277
    %v1279 = vand.u32 %v1278, 4294901760
    %1280 = vmatpush1.msra.mxu0 %v1279
    %1281 = vmatprep.subr.mxu0 0.0
    %v1282 = vand.u32 %v763, 4294901760
    %v1283 = vsub.f32 %v763, %v1282
    %v1284 = vand.u32 %v1283, 4294901760
    %1285 = vmatpush1.msra.mxu0 %v1284
    %1286 = vmatprep.subr.mxu0 0.0
    %1287 = vmatpush1.msra.mxu0 0.0
    %1288 = vmatprep.subr.mxu0 0.0
    %1289 = vmatpush1.msra.mxu0 0.0
    %1290 = vmatprep.subr.mxu0 0.0
    %1291 = vmatpush1.msra.mxu0 0.0
    %1292 = vmatprep.subr.mxu0 0.0
    %1293 = vmatpush1.msra.mxu0 0.0
    %1294 = vmatprep.subr.mxu0 0.0
    %1295 = vmatpush1.msra.mxu0 0.0
    %1296 = vmatprep.subr.mxu0 0.0
    %1297 = vmatpush1.msra.mxu0 0.0
    %1298 = vmatprep.subr.mxu0 0.0
    %1299 = vmatpush1.msra.mxu0 0.0
    %1300 = vmatprep.subr.mxu0 0.0
    %1301 = vmatpush1.msra.mxu0 0.0
    %1302 = vmatprep.subr.mxu0 0.0
    %1303 = vmatpush1.msra.mxu0 0.0
    %1304 = vmatprep.subr.mxu0 0.0
    %1305 = vmatpush1.msra.mxu0 0.0
    %1306 = vmatprep.subr.mxu0 0.0
    %1307 = vmatpush1.msra.mxu0 0.0
    %1308 = vmatprep.subr.mxu0 0.0
    %1309 = vmatpush1.msra.mxu0 0.0
    %1310 = vmatprep.subr.mxu0 0.0
    %1311 = vmatpush1.msra.mxu0 0.0
    %1312 = vmatprep.subr.mxu0 0.0
    %1313 = vmatpush1.msra.mxu0 0.0
    %1314 = vmatprep.subr.mxu0 0.0
    %1315 = vmatpush1.msra.mxu0 0.0
    %1316 = vmatprep.subr.mxu0 0.0
    %1317 = vmatpush1.msra.mxu0 0.0
    %1318 = vmatprep.mubr.f32.mxu0 0.0
    %v1319 = vand.u32 %v745, 4294901760
    %1320 = vmatmul.mubr.f32.gmra.mrb[0].mxu0 %v1319
    %v1321 = vpop.f32.mrb[0].mxu0
    %v1322 = vadd.f32 %v1203, %v1321
    %v1323 = vpop.f32.mrb[0].mxu0
    %1324 = vdwg.mxu0
    %1325 = vmatprep.subr.mxu0 0.0
    %v1326 = vand.u32 %v748, 4294901760
    %1327 = vmatpush1.msra.mxu0 %v1326
    %1328 = vmatprep.subr.mxu0 0.0
    %v1329 = vand.u32 %v749, 4294901760
    %1330 = vmatpush1.msra.mxu0 %v1329
    %1331 = vmatprep.subr.mxu0 0.0
    %v1332 = vand.u32 %v750, 4294901760
    %1333 = vmatpush1.msra.mxu0 %v1332
    %1334 = vmatprep.subr.mxu0 0.0
    %v1335 = vand.u32 %v751, 4294901760
    %1336 = vmatpush1.msra.mxu0 %v1335
    %1337 = vmatprep.subr.mxu0 0.0
    %v1338 = vand.u32 %v752, 4294901760
    %1339 = vmatpush1.msra.mxu0 %v1338
    %1340 = vmatprep.subr.mxu0 0.0
    %v1341 = vand.u32 %v753, 4294901760
    %1342 = vmatpush1.msra.mxu0 %v1341
    %1343 = vmatprep.subr.mxu0 0.0
    %v1344 = vand.u32 %v754, 4294901760
    %1345 = vmatpush1.msra.mxu0 %v1344
    %1346 = vmatprep.subr.mxu0 0.0
    %v1347 = vand.u32 %v755, 4294901760
    %1348 = vmatpush1.msra.mxu0 %v1347
    %1349 = vmatprep.subr.mxu0 0.0
    %v1350 = vand.u32 %v756, 4294901760
    %1351 = vmatpush1.msra.mxu0 %v1350
    %1352 = vmatprep.subr.mxu0 0.0
    %v1353 = vand.u32 %v757, 4294901760
    %1354 = vmatpush1.msra.mxu0 %v1353
    %1355 = vmatprep.subr.mxu0 0.0
    %v1356 = vand.u32 %v758, 4294901760
    %1357 = vmatpush1.msra.mxu0 %v1356
    %1358 = vmatprep.subr.mxu0 0.0
    %v1359 = vand.u32 %v759, 4294901760
    %1360 = vmatpush1.msra.mxu0 %v1359
    %1361 = vmatprep.subr.mxu0 0.0
    %v1362 = vand.u32 %v760, 4294901760
    %1363 = vmatpush1.msra.mxu0 %v1362
    %1364 = vmatprep.subr.mxu0 0.0
    %v1365 = vand.u32 %v761, 4294901760
    %1366 = vmatpush1.msra.mxu0 %v1365
    %1367 = vmatprep.subr.mxu0 0.0
    %v1368 = vand.u32 %v762, 4294901760
    %1369 = vmatpush1.msra.mxu0 %v1368
    %1370 = vmatprep.subr.mxu0 0.0
    %v1371 = vand.u32 %v763, 4294901760
    %1372 = vmatpush1.msra.mxu0 %v1371
    %1373 = vmatprep.subr.mxu0 0.0
    %1374 = vmatpush1.msra.mxu0 0.0
    %1375 = vmatprep.subr.mxu0 0.0
    %1376 = vmatpush1.msra.mxu0 0.0
    %1377 = vmatprep.subr.mxu0 0.0
    %1378 = vmatpush1.msra.mxu0 0.0
    %1379 = vmatprep.subr.mxu0 0.0
    %1380 = vmatpush1.msra.mxu0 0.0
    %1381 = vmatprep.subr.mxu0 0.0
    %1382 = vmatpush1.msra.mxu0 0.0
    %1383 = vmatprep.subr.mxu0 0.0
    %1384 = vmatpush1.msra.mxu0 0.0
    %1385 = vmatprep.subr.mxu0 0.0
    %1386 = vmatpush1.msra.mxu0 0.0
    %1387 = vmatprep.subr.mxu0 0.0
    %1388 = vmatpush1.msra.mxu0 0.0
    %1389 = vmatprep.subr.mxu0 0.0
    %1390 = vmatpush1.msra.mxu0 0.0
    %1391 = vmatprep.subr.mxu0 0.0
    %1392 = vmatpush1.msra.mxu0 0.0
    %1393 = vmatprep.subr.mxu0 0.0
    %1394 = vmatpush1.msra.mxu0 0.0
    %1395 = vmatprep.subr.mxu0 0.0
    %1396 = vmatpush1.msra.mxu0 0.0
    %1397 = vmatprep.subr.mxu0 0.0
    %1398 = vmatpush1.msra.mxu0 0.0
    %1399 = vmatprep.subr.mxu0 0.0
    %1400 = vmatpush1.msra.mxu0 0.0
    %1401 = vmatprep.subr.mxu0 0.0
    %1402 = vmatpush1.msra.mxu0 0.0
    %1403 = vmatprep.subr.mxu0 0.0
    %1404 = vmatpush1.msra.mxu0 0.0
    %1405 = vmatprep.mubr.f32.mxu0 0.0
    %v1406 = vand.u32 %v745, 4294901760
    %1407 = vmatmul.mubr.f32.gmra.mrb[0].mxu0 %v1406
    %v1408 = vpop.f32.mrb[0].mxu0
    %v1409 = vadd.f32 %v1322, %v1408
    %v1410 = vpop.f32.mrb[0].mxu0
    %1411 = vdwg.mxu0
    %1412 = vst [vmem:[#allocation11] sm:$0xff] %v1409
    // Predicated region
    $region42: #{char_nnet_forward_fused.1} parent=1 // pred_check
      _
    $region43: #{char_nnet_forward_fused.1} parent=1 // pred_check_branch
      %1414 = sbr.rel (0) target = $region45
    $region44: #{char_nnet_forward_fused.1} parent=1 // pred_region
      %s1416 = ssub.s32 128, 128
      %1417 = vsyncadd [#allocation4], %s1416
      %s1419 = sshll.u32 [#allocation11], 4
      %s1420 = int_to_ptr.vmem [resolvable:$true] %s1419
      %1422 = dma.vmem_to_hbm [thread:$0]  %s1420, 128, %s5, [#allocation4]
    $region45: #{char_nnet_forward_fused.1} parent=1 // pred_fallthru
      _
    // Predicated region
    $region46: #{char_nnet_forward_fused.1} parent=1 // pred_check
      _
    $region47: #{char_nnet_forward_fused.1} parent=1 // pred_check_branch
      %1424 = sbr.rel (0) target = $region49
    $region48: #{char_nnet_forward_fused.1} parent=1 // pred_region
      %1425 = dma.done [#allocation4], 128
    $region49: #{char_nnet_forward_fused.1} parent=1 // pred_fallthru
      _
    %1426 = vsyncpa [#allocation3], 1
    %1427 = vsyncpa [#allocation6], 1
    %1428 = vsyncpa [#allocation9], 1
    %1429 = vsyncpa [#allocation4], 1

</llo_original>
